<compile_context>
chip_gen: v7x
topology: tpu7x:2x2x1
jax: 0.10.0
libtpu: 0.0.40
codegen_flags: <defaults>
</compile_context>

<pallas_src>
import jax
import jax.numpy as jnp
from jax.experimental import pallas as pl
from jax.experimental.pallas import tpu as pltpu

_TM_MAX = 512          # multiple of 256 -> full MXU rows on v6e/v7x
_TN_MAX = 512
_TK_MAX = 1024
# Double-buffered tile footprint at max tiles is ~10 MiB; 48 MiB scoped limit
# is legal on every generation (v7x has 64 MiB physical, v5e/v6e 128 MiB).
_VMEM_LIMIT_BYTES = 48 * 1024 * 1024


def _round_up(x, m):
    return -(-x // m) * m


def _choose_tile(dim, max_tile, align):
    """Pick (tile, padded_dim): tile % align == 0, padded_dim % tile == 0,
    tile <= max_tile, with minimal padding (near-equal tiles for large dims)."""
    if dim <= max_tile:
        t = _round_up(dim, align)
        return t, t
    ntiles = -(-dim // max_tile)
    tile = _round_up(-(-dim // ntiles), align)
    return tile, tile * ntiles


def _bmm_kernel_single_k(lhs_ref, rhs_ref, out_ref):
    # lhs_ref: [1, tm, K], rhs_ref: [1, K, tn], out_ref: [1, tm, tn].
    # Whole contraction in one MXU pass; no accumulator needed.
    out_ref[0] = jnp.dot(
        lhs_ref[0], rhs_ref[0], preferred_element_type=jnp.float32
    ).astype(out_ref.dtype)


def _bmm_kernel_tiled_k(lhs_ref, rhs_ref, out_ref):
    # Output block is VMEM-resident across the (innermost) K axis, and the
    # output dtype is f32, so accumulate straight into out_ref (no scratch).
    @pl.when(pl.program_id(3) == 0)
    def _():
        out_ref[...] = jnp.zeros_like(out_ref)

    out_ref[0] += jnp.dot(
        lhs_ref[0], rhs_ref[0], preferred_element_type=jnp.float32
    )


def matmul3d(lhs, rhs):
    """torch.matmul for 3-D tensors: [Bl, M, K] @ [Br, K, N] -> [B, M, N]."""
    Bl, M, K = lhs.shape
    Br, K2, N = rhs.shape
    assert K == K2, "contraction dims must match"
    assert Bl == Br or Bl == 1 or Br == 1, "batch dims must be broadcastable"
    B = max(Bl, Br)
    out_dtype = jnp.promote_types(lhs.dtype, rhs.dtype)
    # TODO(synk): direct-into-output accumulation assumes a 32-bit output
    # dtype; the Matmul3D module is float32-only so this always holds here.

    # Tile / padded-dim selection. M aligned to sublanes (8), N aligned to
    # lanes (128, lane-dense stores), K untouched when it fits one tile.
    tm, Mp = _choose_tile(M, _TM_MAX, 8)
    tn, Np = _choose_tile(N, _TN_MAX, 128)
    if K <= _TK_MAX:
        tk, Kp = K, K                      # single K step, zero K padding
    else:
        tk, Kp = _choose_tile(K, _TK_MAX, 128)   # zero-pad => safe accumulation

    # One fused pad per operand (no-op when nothing is padded).
    if Mp != M or Kp != K:
        lhs = jnp.pad(lhs, ((0, 0), (0, Mp - M), (0, Kp - K)))
    if Kp != K or Np != N:
        rhs = jnp.pad(rhs, ((0, 0), (0, Kp - K), (0, Np - N)))

    out_shape = jax.ShapeDtypeStruct((B, Mp, Np), out_dtype)

    if Kp == tk:
        # -------- K fits in one tile: 3-D grid, no accumulator. --------
        grid = (B, Mp // tm, Np // tn)
        lhs_map = (lambda b, i, j: (b, i, 0)) if Bl > 1 else \
                  (lambda b, i, j: (0, i, 0))
        rhs_map = (lambda b, i, j: (b, 0, j)) if Br > 1 else \
                  (lambda b, i, j: (0, 0, j))
        out_p = pl.pallas_call(
            _bmm_kernel_single_k,
            out_shape=out_shape,
            grid_spec=pltpu.PrefetchScalarGridSpec(
                num_scalar_prefetch=0,
                grid=grid,
                in_specs=[
                    pl.BlockSpec((1, tm, Kp), lhs_map),
                    pl.BlockSpec((1, Kp, tn), rhs_map),
                ],
                out_specs=pl.BlockSpec((1, tm, tn), lambda b, i, j: (b, i, j)),
            ),
            compiler_params=pltpu.CompilerParams(
                dimension_semantics=("parallel", "parallel", "parallel"),
                vmem_limit_bytes=_VMEM_LIMIT_BYTES,
            ),
        )(lhs, rhs)
    else:
        # -------- K tiled: 4-D grid, accumulate into resident out block. ----
        grid = (B, Mp // tm, Np // tn, Kp // tk)
        lhs_map = (lambda b, i, j, k: (b, i, k)) if Bl > 1 else \
                  (lambda b, i, j, k: (0, i, k))
        rhs_map = (lambda b, i, j, k: (b, k, j)) if Br > 1 else \
                  (lambda b, i, j, k: (0, k, j))
        out_p = pl.pallas_call(
            _bmm_kernel_tiled_k,
            out_shape=out_shape,
            grid_spec=pltpu.PrefetchScalarGridSpec(
                num_scalar_prefetch=0,
                grid=grid,
                in_specs=[
                    pl.BlockSpec((1, tm, tk), lhs_map),
                    pl.BlockSpec((1, tk, tn), rhs_map),
                ],
                out_specs=pl.BlockSpec((1, tm, tn),
                                       lambda b, i, j, k: (b, i, j)),
            ),
            compiler_params=pltpu.CompilerParams(
                dimension_semantics=("parallel", "parallel", "parallel",
                                     "arbitrary"),
                vmem_limit_bytes=_VMEM_LIMIT_BYTES,
            ),
        )(lhs, rhs)

    if Mp != M or Np != N:
        out_p = out_p[:, :M, :N]
    return out_p


if __name__ == "__main__":
    key = jax.random.PRNGKey(0)
    k1, k2, k3, k4 = jax.random.split(key, 4)

    # Small 3-D shapes consistent with Matmul3D: lhs [B, M, K] @ rhs [B, K, N].
    B, M, K, N = 2, 8, 32, 16
    lhs = jax.random.normal(k1, (B, M, K), dtype=jnp.float32)
    rhs = jax.random.normal(k2, (B, K, N), dtype=jnp.float32)

    out = matmul3d(lhs, rhs)
    jax.block_until_ready(out)

    ref = jnp.matmul(lhs, rhs)
    assert out.shape == (B, M, N)
    assert out.dtype == jnp.float32
    assert jnp.allclose(out, ref, atol=1e-5, rtol=1e-5)

    # Secondary check: exercises the K-tiled accumulation path (K > 1024),
    # non-aligned M/N padding and batch broadcasting (rhs batch == 1).
    B2, M2, K2_, N2 = 2, 33, 1536, 20
    lhs2 = jax.random.normal(k3, (B2, M2, K2_), dtype=jnp.float32)
    rhs2 = jax.random.normal(k4, (1, K2_, N2), dtype=jnp.float32)
    out2 = matmul3d(lhs2, rhs2)
    jax.block_until_ready(out2)
    ref2 = jnp.matmul(lhs2, rhs2)
    assert out2.shape == (B2, M2, N2)
    assert jnp.allclose(out2, ref2, atol=1e-3, rtol=1e-4)

    print("KERNEL_OK")
</pallas_src>

<mosaic_0001>
module attributes {stable_mosaic.version = 11 : i64} {
  func.func @_bmm_kernel_single_k(%arg0: i32, %arg1: i32, %arg2: i32, %arg3: memref<1x8x32xf32, #tpu.memory_space<vmem>>, %arg4: memref<1x32x128xf32, #tpu.memory_space<vmem>>, %arg5: memref<1x8x128xf32, #tpu.memory_space<vmem>>) attributes {dimension_semantics = [#tpu.dimension_semantics<parallel>, #tpu.dimension_semantics<parallel>, #tpu.dimension_semantics<parallel>], iteration_bounds = array<i64: 2, 1, 1>, scalar_prefetch = 0 : i64, scratch_operands = 0 : i64, tpu.core_type = #tpu.core_type<tc>, window_params = [{transform_indices = @transform_0, window_bounds = array<i64: 1, 8, 32>}, {transform_indices = @transform_1, window_bounds = array<i64: 1, 32, 128>}, {transform_indices = @transform_2, window_bounds = array<i64: 1, 8, 128>}]} {
    %c0 = arith.constant 0 : index
    %c0_0 = arith.constant 0 : index
    %c0_1 = arith.constant 0 : index
    %0 = vector.load %arg3[%c0, %c0_0, %c0_1] : memref<1x8x32xf32, #tpu.memory_space<vmem>>, vector<1x8x32xf32>
    %1 = vector.shape_cast %0 : vector<1x8x32xf32> to vector<8x32xf32>
    %c0_2 = arith.constant 0 : index
    %c0_3 = arith.constant 0 : index
    %c0_4 = arith.constant 0 : index
    %2 = vector.load %arg4[%c0_2, %c0_3, %c0_4] : memref<1x32x128xf32, #tpu.memory_space<vmem>>, vector<1x32x128xf32>
    %3 = vector.shape_cast %2 : vector<1x32x128xf32> to vector<32x128xf32>
    %cst = arith.constant dense<0.000000e+00> : vector<8x128xf32>
    %4 = tpu.matmul %1, %3, %cst {dimension_numbers = #tpu.dot_dimension_numbers<[1], [0], [0], [1], [0, 0, 1, 1], [], []>} : vector<8x32xf32>, vector<32x128xf32>, vector<8x128xf32> -> vector<8x128xf32>
    %c0_5 = arith.constant 0 : index
    %c0_6 = arith.constant 0 : index
    %c0_7 = arith.constant 0 : index
    %5 = vector.load %arg5[%c0_5, %c0_6, %c0_7] : memref<1x8x128xf32, #tpu.memory_space<vmem>>, vector<1x8x128xf32>
    %6 = vector.shape_cast %5 : vector<1x8x128xf32> to vector<8x128xf32>
    %7 = vector.shape_cast %4 : vector<8x128xf32> to vector<1x8x128xf32>
    tpu.vector_store %arg5[%c0_5, %c0_6, %c0_7], %7 {strides = array<i32>} : memref<1x8x128xf32, #tpu.memory_space<vmem>>, vector<1x8x128xf32>,
    return
  }
  func.func @transform_0(%arg0: i32, %arg1: i32, %arg2: i32) -> (i32, i32, i32) {
    %c0_i32 = arith.constant 0 : i32
    %c0_i32_0 = arith.constant 0 : i32
    return %arg0, %arg1, %c0_i32 : i32, i32, i32
  }
  func.func @transform_1(%arg0: i32, %arg1: i32, %arg2: i32) -> (i32, i32, i32) {
    %c0_i32 = arith.constant 0 : i32
    %c0_i32_0 = arith.constant 0 : i32
    return %arg0, %c0_i32, %arg2 : i32, i32, i32
  }
  func.func @transform_2(%arg0: i32, %arg1: i32, %arg2: i32) -> (i32, i32, i32) {
    %c0_i32 = arith.constant 0 : i32
    return %arg0, %arg1, %arg2 : i32, i32, i32
  }
}

</mosaic_0001>

<llo_original>
// kernel: tpu_custom_call.1
$region0: #{tpu_custom_call.1}
  #allocation0 [shape = 'u32[]', space=smem, size = 0x4, offset = 0x4, fixed_abs, tag = 'smem constant byte address 0x4 - core index']
  #allocation1 [shape = 'u32[144,128]{1,0:T(1,128)}', space=vmem, size = 0x12000, scoped, tag = 'internal scratch']
  %s0 = inlined_call_operand.hbm [shape: f32[2,8,32], index: 0, kind: input, shape index: {}]
  %s1 = inlined_call_operand.hbm [shape: f32[2,32,128], index: 1, kind: input, shape index: {}]
  %s2 = inlined_call_operand.hbm [shape: f32[2,8,128], index: 2, kind: output, shape index: {}]
  %s3 = sld [smem:[#allocation0]]
  $region49: #{tpu_custom_call.1} parent=0
    _
  %s5 = ssub.s32 1, %s3
  %s6 = scalar_select 0, %s5, %s3
  $region1: #{tpu_custom_call.1} parent=0
    #allocation2 [shape = 'u8[8192]{0}', space=vmem, size = 0x2000, scoped, tag = 'input window, operand 0']
    #allocation3 [shape = 's32[2]{0}', space=sflag, size = 0x8, scoped, tag = 'scoped memory for tpu_custom_call.1']
    #allocation4 [shape = 's32[2]{0}', space=sflag, size = 0x8, scoped, tag = 'scoped memory for tpu_custom_call.1']
    #allocation5 [shape = 'u8[32768]{0}', space=vmem, size = 0x8000, scoped, tag = 'input window, operand 1']
    #allocation6 [shape = 's32[2]{0}', space=sflag, size = 0x8, scoped, tag = 'scoped memory for tpu_custom_call.1']
    #allocation7 [shape = 'u8[8192]{0}', space=vmem, size = 0x2000, scoped, tag = 'output window, operand 0']
    %7 = vsyncpa [#allocation3], 0
    %s8 = scalar_lea.sflag [#allocation3], 1
    %9 = vsyncpa %s8, 0
    %10 = vsyncpa [#allocation6], 0
    %s11 = scalar_lea.sflag [#allocation6], 1
    %12 = vsyncpa %s11, 0
    %13 = vsyncpa [#allocation4], 0
    %s14 = scalar_lea.sflag [#allocation4], 1
    %15 = vsyncpa %s14, 0
    loop: start=0, step=1, limit=4
    $region2: #{tpu_custom_call.1} parent=1 // loop_pre_header
      _
    $region3: #{tpu_custom_call.1} parent=1 // loop_header
      %s17 = sphi 0, %s21
      %p18 = scmp.ge.s32.totalorder %s17, 4
      %s24 = sphi 0, %s43
      %s25 = sphi 0, %s39
      %s26 = sphi 0, %s35
      %s27 = sphi 0, %s24
      %s28 = sphi 0, %s25
      %s29 = sphi 0, %s26
      %s30 = sphi 0, %s27
      %s31 = sphi 0, %s28
      %s32 = sphi 0, %s29
      %s48 = sphi 0, %s50
      %s51 = sphi 0, %s48
      %s52 = sphi 0, %s51
      %s68 = sphi 0, %s52
      %s76 = sphi 0, %s78
      %s79 = sphi 0, %s76
      %s80 = sphi 0, %s79
      %s96 = sphi 0, %s80
      %s106 = sphi 0, %s108
      %s109 = sphi 0, %s106
      %s110 = sphi 0, %s109
      %s126 = sphi 0, %s110
    $region4: #{tpu_custom_call.1} parent=1 // loop_header_branch
      %20 = sbr.rel (%p18) target = $region8
    $region5: #{tpu_custom_call.1} parent=1 // loop_body
      %s22 = ssub.s32 %s17, 1
      %s23 = ssub.s32 %s17, 2
      %s33 = sadd.s32 1, %s26
      %p34 = scmp.ge.s32.totalorder %s33, 1
      %s35 = scalar_select %p34, 0, %s33
      %s36 = sadd.s32 1, %s25
      %s37 = scalar_select %p34, %s36, %s25
      %p38 = scmp.ge.s32.totalorder %s37, 1
      %s39 = scalar_select %p38, 0, %s37
      %s40 = sadd.s32 1, %s24
      %s41 = scalar_select %p38, %s40, %s24
      %p42 = scmp.ge.s32.totalorder %s41, 2
      %s43 = scalar_select %p42, 0, %s41
      %s44 = ssub.s32 %s24, %s43
      %s45 = ssub.s32 %s25, %s39
      %s46 = sor.u32 %s44, %s45
      %p47 = scmp.eq.s32.totalorder %s46, 0
      %s49 = sadd.s32 %s48, 1
      %s50 = scalar_select %p47, %s48, %s49
      %p53 = pneg %p47
      %p54 = scmp.eq.s32.totalorder %s17, 1
      %p55 = por %p53, %p54
      %p56 = scmp.ne.s32.totalorder %s48, %s51
      %p57 = scmp.eq.s32.totalorder %s17, 0
      %p58 = por %p56, %p57
      %p59 = scmp.ne.s32.totalorder %s48, %s51
      %p60 = scmp.eq.s32.totalorder %s22, 1
      %p61 = por %p59, %p60
      %p62 = scmp.ne.s32.totalorder %s51, %s52
      %p63 = scmp.eq.s32.totalorder %s22, 0
      %p64 = por %p62, %p63
      %p65 = scmp.ne.s32.totalorder %s51, %s52
      %p66 = scmp.eq.s32.totalorder %s23, 1
      %p67 = por %p65, %p66
      %p69 = scmp.ne.s32.totalorder %s52, %s68
      %p70 = scmp.eq.s32.totalorder %s23, 0
      %p71 = por %p69, %p70
      %s72 = ssub.s32 %s24, %s43
      %s73 = ssub.s32 %s26, %s35
      %s74 = sor.u32 %s72, %s73
      %p75 = scmp.eq.s32.totalorder %s74, 0
      %s77 = sadd.s32 %s76, 1
      %s78 = scalar_select %p75, %s76, %s77
      %p81 = pneg %p75
      %p82 = scmp.eq.s32.totalorder %s17, 1
      %p83 = por %p81, %p82
      %p84 = scmp.ne.s32.totalorder %s76, %s79
      %p85 = scmp.eq.s32.totalorder %s17, 0
      %p86 = por %p84, %p85
      %p87 = scmp.ne.s32.totalorder %s76, %s79
      %p88 = scmp.eq.s32.totalorder %s22, 1
      %p89 = por %p87, %p88
      %p90 = scmp.ne.s32.totalorder %s79, %s80
      %p91 = scmp.eq.s32.totalorder %s22, 0
      %p92 = por %p90, %p91
      %p93 = scmp.ne.s32.totalorder %s79, %s80
      %p94 = scmp.eq.s32.totalorder %s23, 1
      %p95 = por %p93, %p94
      %p97 = scmp.ne.s32.totalorder %s80, %s96
      %p98 = scmp.eq.s32.totalorder %s23, 0
      %p99 = por %p97, %p98
      %s100 = ssub.s32 %s24, %s43
      %s101 = ssub.s32 %s25, %s39
      %s102 = sor.u32 %s100, %s101
      %s103 = ssub.s32 %s26, %s35
      %s104 = sor.u32 %s102, %s103
      %p105 = scmp.eq.s32.totalorder %s104, 0
      %s107 = sadd.s32 %s106, 1
      %s108 = scalar_select %p105, %s106, %s107
      %p111 = pneg %p105
      %p112 = scmp.eq.s32.totalorder %s17, 1
      %p113 = por %p111, %p112
      %p114 = scmp.ne.s32.totalorder %s106, %s109
      %p115 = scmp.eq.s32.totalorder %s17, 0
      %p116 = por %p114, %p115
      %p117 = scmp.ne.s32.totalorder %s106, %s109
      %p118 = scmp.eq.s32.totalorder %s22, 1
      %p119 = por %p117, %p118
      %p120 = scmp.ne.s32.totalorder %s109, %s110
      %p121 = scmp.eq.s32.totalorder %s22, 0
      %p122 = por %p120, %p121
      %p123 = scmp.ne.s32.totalorder %s109, %s110
      %p124 = scmp.eq.s32.totalorder %s23, 1
      %p125 = por %p123, %p124
      %p127 = scmp.ne.s32.totalorder %s110, %s126
      %p128 = scmp.eq.s32.totalorder %s23, 0
      %p129 = por %p127, %p128
      %p130 = scmp.le.s32.totalorder 1, %s17
      %p131 = scmp.lt.s32.totalorder %s17, 3
      %p132 = pnand %p130, %p131
      %p133 = pneg %p132
      // Predicated region
      $region9: #{tpu_custom_call.1} parent=5 // pred_check
        _
      $region10: #{tpu_custom_call.1} parent=5 // pred_check_branch
        %135 = sbr.rel (%p132) target = $region12
      $region11: #{tpu_custom_call.1} parent=5 // pred_region
        %s136 = ssub.s32 %s17, 1
      $region12: #{tpu_custom_call.1} parent=5 // pred_fallthru
        _
      %p137 = scmp.lt.s32.totalorder %s17, 2
      // Predicated region
      $region13: #{tpu_custom_call.1} parent=5 // pred_check
        %p138 = pneg %p137
      $region14: #{tpu_custom_call.1} parent=5 // pred_check_branch
        %140 = sbr.rel (%p138) target = $region16
      $region15: #{tpu_custom_call.1} parent=5 // pred_region
        // Predicated region
        $region17: #{tpu_custom_call.1} parent=15 // pred_check
          %p141 = pneg %p58
        $region18: #{tpu_custom_call.1} parent=15 // pred_check_branch
          %143 = sbr.rel (%p141) target = $region20
        $region19: #{tpu_custom_call.1} parent=15 // pred_region
          %s144 = sand.u32 %s48, 1
          %s145 = scalar_lea.sflag [#allocation3], %s144
          %s146 = sand.u32 %s48, 1
          %s147 = smul.addr %s146, 8
          %s148 = scalar_lea.vmem [#allocation2], %s147
          %s150 = ssub.s32 128, 128
          %151 = vsyncadd %s145, %s150
          %s152 = sadd.s32 %s25, %s24
          %s153 = smul.addr %s152, 128
          %s154 = scalar_lea.hbm %s0, %s153
          %s156 = sshll.u32 %s148, 4
          %s157 = int_to_ptr.vmem [resolvable:$true] %s156
          %159 = dma.hbm_to_vmem [thread:$0]  %s154, 128, %s157, %s145
        $region20: #{tpu_custom_call.1} parent=15 // pred_fallthru
          _
        // Predicated region
        $region21: #{tpu_custom_call.1} parent=15 // pred_check
          %p160 = pneg %p86
        $region22: #{tpu_custom_call.1} parent=15 // pred_check_branch
          %162 = sbr.rel (%p160) target = $region24
        $region23: #{tpu_custom_call.1} parent=15 // pred_region
          %s163 = sand.u32 %s76, 1
          %s164 = scalar_lea.sflag [#allocation6], %s163
          %s165 = sand.u32 %s76, 1
          %s166 = smul.addr %s165, 32
          %s167 = scalar_lea.vmem [#allocation5], %s166
          %s169 = ssub.s32 512, 512
          %170 = vsyncadd %s164, %s169
          %s171 = smul.addr %s24, 4
          %s172 = sadd.s32 %s26, %s171
          %s173 = smul.addr %s172, 128
          %s174 = scalar_lea.hbm %s1, %s173
          %s175 = sshll.u32 %s167, 4
          %s176 = int_to_ptr.vmem [resolvable:$true] %s175
          %181 = dma.hbm_to_vmem [thread:$0]  %s174, 512, %s176, %s164, 128, 128, 8
        $region24: #{tpu_custom_call.1} parent=15 // pred_fallthru
          _
      $region16: #{tpu_custom_call.1} parent=5 // pred_fallthru
        _
      %p182 = scmp.le.s32.totalorder 1, %s17
      %p183 = scmp.lt.s32.totalorder %s17, 3
      %p184 = pnand %p182, %p183
      %p185 = pneg %p184
      // Predicated region
      $region25: #{tpu_custom_call.1} parent=5 // pred_check
        _
      $region26: #{tpu_custom_call.1} parent=5 // pred_check_branch
        %187 = sbr.rel (%p184) target = $region28
      $region27: #{tpu_custom_call.1} parent=5 // pred_region
        %s188 = ssub.s32 %s17, 1
        %s189 = sand.u32 %s51, 1
        %s190 = scalar_lea.sflag [#allocation3], %s189
        %s191 = sand.u32 %s51, 1
        %s192 = smul.addr %s191, 8
        %s193 = scalar_lea.vmem [#allocation2], %s192
        // Predicated region
        $region29: #{tpu_custom_call.1} parent=27 // pred_check
          %p194 = pneg %p64
        $region30: #{tpu_custom_call.1} parent=27 // pred_check_branch
          %196 = sbr.rel (%p194) target = $region32
        $region31: #{tpu_custom_call.1} parent=27 // pred_region
          %197 = dma.done %s190, 128
        $region32: #{tpu_custom_call.1} parent=27 // pred_fallthru
          _
        %s198 = sand.u32 %s79, 1
        %s199 = scalar_lea.sflag [#allocation6], %s198
        %s200 = sand.u32 %s79, 1
        %s201 = smul.addr %s200, 32
        %s202 = scalar_lea.vmem [#allocation5], %s201
        // Predicated region
        $region33: #{tpu_custom_call.1} parent=27 // pred_check
          %p203 = pneg %p92
        $region34: #{tpu_custom_call.1} parent=27 // pred_check_branch
          %205 = sbr.rel (%p203) target = $region36
        $region35: #{tpu_custom_call.1} parent=27 // pred_region
          %206 = dma.done %s199, 512
        $region36: #{tpu_custom_call.1} parent=27 // pred_fallthru
          _
        %s207 = sand.u32 %s51, 1
        %s208 = scalar_lea.sflag [#allocation3], %s207
        %s209 = sand.u32 %s51, 1
        %s210 = smul.addr %s209, 8
        %s211 = scalar_lea.vmem [#allocation2], %s210
        %p212 = pneg %p64
        %p213 = pneg %p61
        %s214 = sand.u32 %s79, 1
        %s215 = scalar_lea.sflag [#allocation6], %s214
        %s216 = sand.u32 %s79, 1
        %s217 = smul.addr %s216, 32
        %s218 = scalar_lea.vmem [#allocation5], %s217
        %p219 = pneg %p92
        %p220 = pneg %p89
        %p221 = pneg %p122
        %p222 = pneg %p119
        %s223 = sand.u32 %s109, 1
        %s224 = scalar_lea.sflag [#allocation4], %s223
        %s225 = sand.u32 %s109, 1
        %s226 = smul.addr %s225, 8
        %s227 = scalar_lea.vmem [#allocation7], %s226
        %v228 = vld [vmem:[%s193] sm:$0xff]
        %v229 = vld [vmem:[%s202] sm:$0xff]
        %v230 = vld [vmem:[%s202 + $0x8] sm:$0xff]
        %v231 = vld [vmem:[%s202 + $0x10] sm:$0xff]
        %v232 = vld [vmem:[%s202 + $0x18] sm:$0xff]
        %vm233 = vcmask 261120
        %v235 = vsel %vm233, %v228, 0
        %237 = vmatprep.subr.mxu0 0.0
        %238 = vmatpush1.msra.mxu0 %v229
        %239 = vmatprep.subr.mxu0 0.0
        %240 = vmatpush1.msra.mxu0 %v230
        %241 = vmatprep.subr.mxu0 0.0
        %242 = vmatpush1.msra.mxu0 %v231
        %243 = vmatprep.subr.mxu0 0.0
        %244 = vmatpush1.msra.mxu0 %v232
        %245 = vmatprep.subr.mxu0 0.0
        %246 = vmatpush1.msra.mxu0 0.0
        %247 = vmatprep.subr.mxu0 0.0
        %248 = vmatpush1.msra.mxu0 0.0
        %249 = vmatprep.subr.mxu0 0.0
        %250 = vmatpush1.msra.mxu0 0.0
        %251 = vmatprep.subr.mxu0 0.0
        %252 = vmatpush1.msra.mxu0 0.0
        %253 = vmatprep.subr.mxu0 0.0
        %254 = vmatpush1.msra.mxu0 0.0
        %255 = vmatprep.subr.mxu0 0.0
        %256 = vmatpush1.msra.mxu0 0.0
        %257 = vmatprep.subr.mxu0 0.0
        %258 = vmatpush1.msra.mxu0 0.0
        %259 = vmatprep.subr.mxu0 0.0
        %260 = vmatpush1.msra.mxu0 0.0
        %261 = vmatprep.subr.mxu0 0.0
        %262 = vmatpush1.msra.mxu0 0.0
        %263 = vmatprep.subr.mxu0 0.0
        %264 = vmatpush1.msra.mxu0 0.0
        %265 = vmatprep.subr.mxu0 0.0
        %266 = vmatpush1.msra.mxu0 0.0
        %267 = vmatprep.subr.mxu0 0.0
        %268 = vmatpush1.msra.mxu0 0.0
        %269 = vmatprep.subr.mxu0 0.0
        %270 = vmatpush1.msra.mxu0 0.0
        %271 = vmatprep.subr.mxu0 0.0
        %272 = vmatpush1.msra.mxu0 0.0
        %273 = vmatprep.subr.mxu0 0.0
        %274 = vmatpush1.msra.mxu0 0.0
        %275 = vmatprep.subr.mxu0 0.0
        %276 = vmatpush1.msra.mxu0 0.0
        %277 = vmatprep.subr.mxu0 0.0
        %278 = vmatpush1.msra.mxu0 0.0
        %279 = vmatprep.subr.mxu0 0.0
        %280 = vmatpush1.msra.mxu0 0.0
        %281 = vmatprep.subr.mxu0 0.0
        %282 = vmatpush1.msra.mxu0 0.0
        %283 = vmatprep.subr.mxu0 0.0
        %284 = vmatpush1.msra.mxu0 0.0
        %285 = vmatprep.subr.mxu0 0.0
        %286 = vmatpush1.msra.mxu0 0.0
        %287 = vmatprep.subr.mxu0 0.0
        %288 = vmatpush1.msra.mxu0 0.0
        %289 = vmatprep.subr.mxu0 0.0
        %290 = vmatpush1.msra.mxu0 0.0
        %291 = vmatprep.subr.mxu0 0.0
        %292 = vmatpush1.msra.mxu0 0.0
        %293 = vmatprep.subr.mxu0 0.0
        %294 = vmatpush1.msra.mxu0 0.0
        %295 = vmatprep.subr.mxu0 0.0
        %296 = vmatpush1.msra.mxu0 0.0
        %297 = vmatprep.subr.mxu0 0.0
        %298 = vmatpush1.msra.mxu0 0.0
        %299 = vmatprep.subr.mxu0 0.0
        %300 = vmatpush1.msra.mxu0 0.0
        %301 = vmatprep.mubr.f32.mxu0 0.0
        %302 = vmatmul.mubr.f32.gmra.mrb[0].mxu0 %v235
        %v303 = vpop.f32.mrb[0].mxu0
        %v304 = vadd.f32 0.0, %v303
        %v305 = vpop.f32.mrb[0].mxu0
        %306 = vdwg.mxu0
        %307 = vst [vmem:[%s227] sm:$0xff] %v304
        %s308 = sand.u32 %s109, 1
        %s309 = scalar_lea.sflag [#allocation4], %s308
        %s310 = sand.u32 %s109, 1
        %s311 = smul.addr %s310, 8
        %s312 = scalar_lea.vmem [#allocation7], %s311
        // Predicated region
        $region37: #{tpu_custom_call.1} parent=27 // pred_check
          %p313 = pneg %p119
        $region38: #{tpu_custom_call.1} parent=27 // pred_check_branch
          %315 = sbr.rel (%p313) target = $region40
        $region39: #{tpu_custom_call.1} parent=27 // pred_region
          %s317 = ssub.s32 128, 128
          %318 = vsyncadd %s309, %s317
          %s319 = sadd.s32 %s29, %s28
          %s320 = sadd.s32 %s319, %s27
          %s321 = smul.addr %s320, 128
          %s322 = scalar_lea.hbm %s2, %s321
          %s324 = sshll.u32 %s312, 4
          %s325 = int_to_ptr.vmem [resolvable:$true] %s324
          %327 = dma.vmem_to_hbm [thread:$0]  %s325, 128, %s322, %s309
        $region40: #{tpu_custom_call.1} parent=27 // pred_fallthru
          _
      $region28: #{tpu_custom_call.1} parent=5 // pred_fallthru
        _
      %p328 = scmp.le.s32.totalorder 2, %s17
      // Predicated region
      $region41: #{tpu_custom_call.1} parent=5 // pred_check
        %p329 = pneg %p328
      $region42: #{tpu_custom_call.1} parent=5 // pred_check_branch
        %331 = sbr.rel (%p329) target = $region44
      $region43: #{tpu_custom_call.1} parent=5 // pred_region
        %s332 = ssub.s32 %s17, 2
        // Predicated region
        $region45: #{tpu_custom_call.1} parent=43 // pred_check
          %p333 = pneg %p125
        $region46: #{tpu_custom_call.1} parent=43 // pred_check_branch
          %335 = sbr.rel (%p333) target = $region48
        $region47: #{tpu_custom_call.1} parent=43 // pred_region
          %s336 = sand.u32 %s110, 1
          %s337 = scalar_lea.sflag [#allocation4], %s336
          %s338 = sand.u32 %s110, 1
          %s339 = smul.addr %s338, 8
          %s340 = scalar_lea.vmem [#allocation7], %s339
          %341 = dma.done %s337, 128
        $region48: #{tpu_custom_call.1} parent=43 // pred_fallthru
          _
      $region44: #{tpu_custom_call.1} parent=5 // pred_fallthru
        _
    $region6: #{tpu_custom_call.1} parent=1 // loop_footer
      %s21 = sadd.s32 1, %s17
    $region7: #{tpu_custom_call.1} parent=1 // loop_footer_branch
      %16 = sbr.rel target = $region3
    $region8: #{tpu_custom_call.1} parent=1 // loop_exit
      _
    %342 = vsyncpa [#allocation3], 1
    %s343 = scalar_lea.sflag [#allocation3], 1
    %344 = vsyncpa %s343, 1
    %345 = vsyncpa [#allocation6], 1
    %s346 = scalar_lea.sflag [#allocation6], 1
    %347 = vsyncpa %s346, 1
    %348 = vsyncpa [#allocation4], 1
    %s349 = scalar_lea.sflag [#allocation4], 1
    %350 = vsyncpa %s349, 1

</llo_original>
